<compile_context>
chip_gen: v5e
topology: v5e:2x2
jax: 0.10.0
libtpu: 0.0.40
codegen_flags: <defaults>
</compile_context>

<pallas_src>
import jax
import jax.numpy as jnp
import numpy as np
from jax.experimental import pallas as pl

HIDDEN = 32
LANE = 128


# ----------------------------------------------------------------------------
# Pallas kernel: single invocation, batch folded into the matmul M dimension.
# ----------------------------------------------------------------------------
def _tgnn_kernel(x_ref,      # VMEM (B*N, F*T)       bf16  node feats, (f,t)-flattened
                 a_ref,      # VMEM (B*N, B*N)       f32   block-diag normalized A_hat
                 wconv_ref,  # VMEM (F*T, 2*T*H)     bf16  fused conv∘gate weights [z | h]
                 sprob_ref,  # VMEM (T*H, H)         bf16  stacked probs[t]*I
                 wlin_ref,   # VMEM (H, OUT_PAD)     bf16  head weight, zero-padded lanes
                 rows_ref,   # VMEM (1, 2*T*H+OUT_PAD) f32 [fused gate bias | padded blin]
                 out_ref):   # VMEM (B*N, OUT_PAD)   f32
    th = sprob_ref.shape[0]          # T*H   (static)
    t2h = wconv_ref.shape[1]         # 2*T*H (static)

    # Per-t GCNConv already composed with the GRU gate linears (valid because
    # H0 == 0 and there is no nonlinearity in between): one bf16 MXU matmul
    # covering every period and every batch row.
    proj = jnp.dot(x_ref[...], wconv_ref[...],
                   preferred_element_type=jnp.float32)              # (B*N, 2*T*H)

    # Graph aggregation for all periods / batches at once (A block-diag over B).
    agg = jnp.dot(a_ref[...], proj, preferred_element_type=jnp.float32)

    gate = agg + rows_ref[:, :t2h]                                  # fused bias (f32)
    z = jax.nn.sigmoid(gate[:, :th])                                # (B*N, T*H)
    h_tilde = jnp.tanh(gate[:, th:])                                # (B*N, T*H)
    g = (1.0 - z) * h_tilde                                         # H_t (H0 == 0)

    # acc = sum_t probs[t] * H_t  as one matmul against stacked probs[t]*I.
    acc = jnp.dot(g.astype(jnp.bfloat16), sprob_ref[...],
                  preferred_element_type=jnp.float32)               # (B*N, H)

    # Head: relu + Linear(H, T), padded to a lane-dense 128-wide store.
    h = jnp.maximum(acc, 0.0)
    y = jnp.dot(h.astype(jnp.bfloat16), wlin_ref[...],
                preferred_element_type=jnp.float32) + rows_ref[:, t2h:]
    out_ref[...] = y


def temporal_gnn_forward(x_bnft, a_hat, params):
    """x_bnft: (B, N, F, T) float32 — same axis convention as the PyTorch module."""
    B, N, F, T = x_bnft.shape
    Hd = HIDDEN
    out_pad = max(LANE, -(-T // LANE) * LANE)

    # (B, N, F, T) -> (B*N, F*T): free contiguous reshape, column order (f, t).
    x_flat = x_bnft.reshape(B * N, F * T)

    probs = jax.nn.softmax(params["att"])
    eye_t = jnp.eye(T, dtype=jnp.float32)

    # ---- fold the GRU gate linears through the GCNConv (all in f32) ---------
    #   z_pre_t = A @ (X_t @ (Wz @ Wlz[:, :H].T)) + (bz @ Wlz[:, :H].T + blz)
    wz_f = params["Wz"] @ params["Wlz"][:, :Hd].T                   # (F, H)
    wh_f = params["Wh"] @ params["Wlh"][:, :Hd].T                   # (F, H)
    bz_f = params["bz"] @ params["Wlz"][:, :Hd].T + params["blz"]   # (H,)
    bh_f = params["bh"] @ params["Wlh"][:, :Hd].T + params["blh"]   # (H,)

    # Block-diagonal over t; rows ordered (f, t) to match x_flat, columns
    # ordered [all z (t, j) | all h (t, j)].
    wcz = jnp.einsum("fj,tu->ftuj", wz_f, eye_t).reshape(F * T, T * Hd)
    wch = jnp.einsum("fj,tu->ftuj", wh_f, eye_t).reshape(F * T, T * Hd)
    w_conv = jnp.concatenate([wcz, wch], axis=1)                    # (F*T, 2*T*H)
    b_gate = jnp.concatenate([jnp.tile(bz_f, T), jnp.tile(bh_f, T)])  # (2*T*H,)

    # ---- attention-weighted sum over t as a matmul --------------------------
    s_prob = jnp.einsum("t,jk->tjk", probs,
                        jnp.eye(Hd, dtype=jnp.float32)).reshape(T * Hd, Hd)

    # ---- head padded to lane-dense width; biases packed into one f32 row ----
    wlin = jnp.zeros((Hd, out_pad), jnp.float32).at[:, :T].set(params["Wlin"].T)
    blin = jnp.zeros((out_pad,), jnp.float32).at[:T].set(params["blin"])
    rows = jnp.concatenate([b_gate, blin]).reshape(1, 2 * T * Hd + out_pad)

    # ---- block-diagonal A over the folded batch (tiny at these sizes) -------
    # For large N / B, switch to a 'parallel' batch grid axis with a per-batch
    # (N, N) A block instead of materializing (B*N, B*N).
    a_bd = jnp.kron(jnp.eye(B, dtype=a_hat.dtype), a_hat)           # (B*N, B*N)

    out_flat = pl.pallas_call(
        _tgnn_kernel,
        out_shape=jax.ShapeDtypeStruct((B * N, out_pad), jnp.float32),
    )(x_flat.astype(jnp.bfloat16),
      a_bd,
      w_conv.astype(jnp.bfloat16),
      s_prob.astype(jnp.bfloat16),
      wlin.astype(jnp.bfloat16),
      rows)

    return out_flat[:, :T].reshape(B, N, T)


# ----------------------------------------------------------------------------
# Glue: GCN normalization (dense A_hat) and a pure-JAX reference of the full
# PyTorch forward (including the dead conv_r / linear_r path) for validation.
# ----------------------------------------------------------------------------
def build_gcn_adj(edge_index, edge_weight, num_nodes):
    src, dst = edge_index[0], edge_index[1]
    loop = jnp.arange(num_nodes, dtype=src.dtype)
    src = jnp.concatenate([src, loop])
    dst = jnp.concatenate([dst, loop])
    w = jnp.concatenate([edge_weight, jnp.ones((num_nodes,), edge_weight.dtype)])
    deg = jnp.zeros((num_nodes,), edge_weight.dtype).at[dst].add(w)
    dinv = jnp.where(deg > 0, jax.lax.rsqrt(deg), 0.0)
    norm = dinv[src] * w * dinv[dst]
    # out_i = sum_{(j->i)} norm_ij * x_j   =>  A_hat[i, j] = norm
    a = jnp.zeros((num_nodes, num_nodes), edge_weight.dtype).at[dst, src].add(norm)
    return a


def reference_forward(x_bnft, a_hat, params):
    B, N, F, T = x_bnft.shape
    Hd = HIDDEN
    probs = jax.nn.softmax(params["att"])
    h0 = jnp.zeros((B, N, Hd), jnp.float32)
    acc = jnp.zeros((B, N, Hd), jnp.float32)
    for t in range(T):
        xt = x_bnft[..., t]                                         # (B, N, F)
        cz = jnp.einsum("ij,bjh->bih", a_hat, xt @ params["Wz"]) + params["bz"]
        cr = jnp.einsum("ij,bjh->bih", a_hat, xt @ params["Wr"]) + params["br"]
        ch = jnp.einsum("ij,bjh->bih", a_hat, xt @ params["Wh"]) + params["bh"]
        z = jax.nn.sigmoid(jnp.concatenate([cz, h0], -1) @ params["Wlz"].T + params["blz"])
        r = jax.nn.sigmoid(jnp.concatenate([cr, h0], -1) @ params["Wlr"].T + params["blr"])
        h_tilde = jnp.tanh(jnp.concatenate([ch, h0 * r], -1) @ params["Wlh"].T + params["blh"])
        h_new = z * h0 + (1.0 - z) * h_tilde
        acc = acc + probs[t] * h_new
    h = jax.nn.relu(acc)
    return h @ params["Wlin"].T + params["blin"]


def make_params(key, node_features, periods):
    Hd = HIDDEN
    ks = jax.random.split(key, 16)
    n = lambda k, shape, s=0.2: (jax.random.normal(k, shape, jnp.float32) * s)
    return {
        "att":  jax.random.uniform(ks[0], (periods,), jnp.float32),     # attention
        "Wz":   n(ks[1], (node_features, Hd)),  "bz": n(ks[2], (Hd,)),  # conv_z
        "Wr":   n(ks[3], (node_features, Hd)),  "br": n(ks[4], (Hd,)),  # conv_r (dead)
        "Wh":   n(ks[5], (node_features, Hd)),  "bh": n(ks[6], (Hd,)),  # conv_h
        "Wlz":  n(ks[7], (Hd, 2 * Hd)),         "blz": n(ks[8], (Hd,)),
        "Wlr":  n(ks[9], (Hd, 2 * Hd)),         "blr": n(ks[10], (Hd,)),
        "Wlh":  n(ks[11], (Hd, 2 * Hd)),        "blh": n(ks[12], (Hd,)),
        "Wlin": n(ks[13], (periods, Hd)),       "blin": n(ks[14], (periods,)),
    }


if __name__ == "__main__":
    B, N, F, T = 2, 16, 4, 8          # batch, nodes, node_features, periods

    key = jax.random.PRNGKey(0)
    k_x, k_w, k_p = jax.random.split(key, 3)

    # Node features (B, N, F, T) — matches the PyTorch module's input layout.
    x = jax.random.normal(k_x, (B, N, F, T), jnp.float32)

    # Bidirectional ring graph, E = 2N edges, positive edge weights.
    i = np.arange(N)
    src = np.concatenate([i, (i + 1) % N]).astype(np.int32)
    dst = np.concatenate([(i + 1) % N, i]).astype(np.int32)
    edge_index = jnp.stack([jnp.asarray(src), jnp.asarray(dst)])
    edge_attr = jax.random.uniform(k_w, (edge_index.shape[1],), jnp.float32,
                                   minval=0.5, maxval=1.5)

    params = make_params(k_p, F, T)
    a_hat = build_gcn_adj(edge_index, edge_attr, N)

    out = jax.block_until_ready(temporal_gnn_forward(x, a_hat, params))
    ref = jax.block_until_ready(reference_forward(x, a_hat, params))

    assert out.shape == (B, N, T), out.shape
    # bf16 MXU operands (f32 accumulation / f32 reference) -> slightly looser tol.
    np.testing.assert_allclose(np.asarray(out), np.asarray(ref), rtol=2e-2, atol=2e-2)
    print("KERNEL_OK")
</pallas_src>

<mosaic_0001>
module attributes {stable_mosaic.version = 11 : i64} {
  func.func @_tgnn_kernel(%arg0: memref<32x32xbf16, #tpu.memory_space<vmem>>, %arg1: memref<32x32xf32, #tpu.memory_space<vmem>>, %arg2: memref<32x512xbf16, #tpu.memory_space<vmem>>, %arg3: memref<256x32xbf16, #tpu.memory_space<vmem>>, %arg4: memref<32x128xbf16, #tpu.memory_space<vmem>>, %arg5: memref<1x640xf32, #tpu.memory_space<vmem>>, %arg6: memref<32x128xf32, #tpu.memory_space<vmem>>) attributes {dimension_semantics = [], scalar_prefetch = 0 : i64, scratch_operands = 0 : i64, tpu.core_type = #tpu.core_type<tc>} {
    %c0 = arith.constant 0 : index
    %c0_0 = arith.constant 0 : index
    %0 = vector.load %arg0[%c0, %c0_0] : memref<32x32xbf16, #tpu.memory_space<vmem>>, vector<32x32xbf16>
    %c0_1 = arith.constant 0 : index
    %c0_2 = arith.constant 0 : index
    %1 = vector.load %arg2[%c0_1, %c0_2] : memref<32x512xbf16, #tpu.memory_space<vmem>>, vector<32x512xbf16>
    %cst = arith.constant dense<0.000000e+00> : vector<32x512xf32>
    %2 = tpu.matmul %0, %1, %cst {dimension_numbers = #tpu.dot_dimension_numbers<[1], [0], [0], [1], [0, 0, 1, 1], [], []>} : vector<32x32xbf16>, vector<32x512xbf16>, vector<32x512xf32> -> vector<32x512xf32>
    %c0_3 = arith.constant 0 : index
    %c0_4 = arith.constant 0 : index
    %3 = vector.load %arg1[%c0_3, %c0_4] : memref<32x32xf32, #tpu.memory_space<vmem>>, vector<32x32xf32>
    %cst_5 = arith.constant dense<0.000000e+00> : vector<32x512xf32>
    %4 = tpu.matmul %3, %2, %cst_5 {dimension_numbers = #tpu.dot_dimension_numbers<[1], [0], [0], [1], [0, 0, 1, 1], [], []>} : vector<32x32xf32>, vector<32x512xf32>, vector<32x512xf32> -> vector<32x512xf32>
    %c0_6 = arith.constant 0 : index
    %c0_7 = arith.constant 0 : index
    %5 = vector.load %arg5[%c0_6, %c0_7] : memref<1x640xf32, #tpu.memory_space<vmem>>, vector<1x512xf32>
    %6 = vector.broadcast %5 : vector<1x512xf32> to vector<32x512xf32>
    %7 = arith.addf %4, %6 : vector<32x512xf32>
    %8 = vector.extract_strided_slice %7 {offsets = [0, 0], sizes = [32, 256], strides = [1, 1]} : vector<32x512xf32> to vector<32x256xf32>
    %9 = arith.negf %8 : vector<32x256xf32>
    %10 = math.exp %9 : vector<32x256xf32>
    %cst_8 = arith.constant 1.000000e+00 : f32
    %11 = vector.broadcast %cst_8 : f32 to vector<32x256xf32>
    %12 = arith.addf %11, %10 : vector<32x256xf32>
    %13 = arith.divf %11, %12 : vector<32x256xf32>
    %14 = vector.extract_strided_slice %7 {offsets = [0, 256], sizes = [32, 256], strides = [1, 1]} : vector<32x512xf32> to vector<32x256xf32>
    %15 = math.tanh %14 : vector<32x256xf32>
    %cst_9 = arith.constant 1.000000e+00 : f32
    %16 = vector.broadcast %cst_9 : f32 to vector<32x256xf32>
    %17 = arith.subf %16, %13 : vector<32x256xf32>
    %18 = arith.mulf %17, %15 : vector<32x256xf32>
    %19 = arith.truncf %18 : vector<32x256xf32> to vector<32x256xbf16>
    %c0_10 = arith.constant 0 : index
    %c0_11 = arith.constant 0 : index
    %20 = vector.load %arg3[%c0_10, %c0_11] : memref<256x32xbf16, #tpu.memory_space<vmem>>, vector<256x32xbf16>
    %cst_12 = arith.constant dense<0.000000e+00> : vector<32x32xf32>
    %21 = tpu.matmul %19, %20, %cst_12 {dimension_numbers = #tpu.dot_dimension_numbers<[1], [0], [0], [1], [0, 0, 1, 1], [], []>} : vector<32x256xbf16>, vector<256x32xbf16>, vector<32x32xf32> -> vector<32x32xf32>
    %cst_13 = arith.constant 0.000000e+00 : f32
    %22 = vector.broadcast %cst_13 : f32 to vector<32x32xf32>
    %23 = arith.maximumf %21, %22 : vector<32x32xf32>
    %24 = arith.truncf %23 : vector<32x32xf32> to vector<32x32xbf16>
    %c0_14 = arith.constant 0 : index
    %c0_15 = arith.constant 0 : index
    %25 = vector.load %arg4[%c0_14, %c0_15] : memref<32x128xbf16, #tpu.memory_space<vmem>>, vector<32x128xbf16>
    %cst_16 = arith.constant dense<0.000000e+00> : vector<32x128xf32>
    %26 = tpu.matmul %24, %25, %cst_16 {dimension_numbers = #tpu.dot_dimension_numbers<[1], [0], [0], [1], [0, 0, 1, 1], [], []>} : vector<32x32xbf16>, vector<32x128xbf16>, vector<32x128xf32> -> vector<32x128xf32>
    %c0_17 = arith.constant 0 : index
    %c512 = arith.constant 512 : index
    %27 = vector.load %arg5[%c0_17, %c512] : memref<1x640xf32, #tpu.memory_space<vmem>>, vector<1x128xf32>
    %28 = vector.broadcast %27 : vector<1x128xf32> to vector<32x128xf32>
    %29 = arith.addf %26, %28 : vector<32x128xf32>
    %c0_18 = arith.constant 0 : index
    %c0_19 = arith.constant 0 : index
    %30 = vector.load %arg6[%c0_18, %c0_19] : memref<32x128xf32, #tpu.memory_space<vmem>>, vector<32x128xf32>
    tpu.vector_store %arg6[%c0_18, %c0_19], %29 {strides = array<i32>} : memref<32x128xf32, #tpu.memory_space<vmem>>, vector<32x128xf32>,
    return
  }
}

</mosaic_0001>

<llo_original>
// kernel: tpu_custom_call.1
$region0: #{tpu_custom_call.1}
  #allocation0 [shape = 'u32[]', space=smem, size = 0x4, offset = 0x4, fixed_abs, tag = 'smem constant byte address 0x4 - core index']
  #allocation1 [shape = 'u32[72,128]{1,0:T(1,128)}', space=vmem, size = 0x9000, scoped, tag = 'internal scratch']
  %s0 = inlined_call_operand.vmem [shape: bf16[32,32], index: 0, kind: input, shape index: {}]
  %s1 = inlined_call_operand.vmem [shape: f32[32,32], index: 1, kind: input, shape index: {}]
  %s2 = inlined_call_operand.vmem [shape: bf16[32,512], index: 2, kind: input, shape index: {}]
  %s3 = inlined_call_operand.vmem [shape: bf16[256,32], index: 3, kind: input, shape index: {}]
  %s4 = inlined_call_operand.vmem [shape: bf16[32,128], index: 4, kind: input, shape index: {}]
  %s5 = inlined_call_operand.vmem [shape: f32[1,640], index: 5, kind: input, shape index: {}]
  %s6 = inlined_call_operand.hbm [shape: f32[32,128], index: 6, kind: output, shape index: {}]
  %s7 = sld [smem:[#allocation0]]
  $region34: #{tpu_custom_call.1} parent=0
    _
  %s9 = ssub.s32 1, %s7
  %s10 = scalar_select 0, %s9, %s7
  $region1: #{tpu_custom_call.1} parent=0
    #allocation2 [shape = 'u8[16384]{0}', space=vmem, size = 0x4000, scoped, tag = 'output window, operand 0, single buffered']
    #allocation3 [shape = 's32[1]{0}', space=sflag, size = 0x4, scoped, tag = 'scoped memory for tpu_custom_call.1']
    %11 = vsyncpa [#allocation3], 0
    // Predicated region
    $region2: #{tpu_custom_call.1} parent=1 // pred_check
      _
    $region3: #{tpu_custom_call.1} parent=1 // pred_check_branch
      %13 = sbr.rel (0) target = $region5
    $region4: #{tpu_custom_call.1} parent=1 // pred_region
      _
    $region5: #{tpu_custom_call.1} parent=1 // pred_fallthru
      _
    // Predicated region
    $region6: #{tpu_custom_call.1} parent=1 // pred_check
      _
    $region7: #{tpu_custom_call.1} parent=1 // pred_check_branch
      %15 = sbr.rel (0) target = $region9
    $region8: #{tpu_custom_call.1} parent=1 // pred_region
      _
    $region9: #{tpu_custom_call.1} parent=1 // pred_fallthru
      _
    // Predicated region
    $region10: #{tpu_custom_call.1} parent=1 // pred_check
      _
    $region11: #{tpu_custom_call.1} parent=1 // pred_check_branch
      %17 = sbr.rel (0) target = $region13
    $region12: #{tpu_custom_call.1} parent=1 // pred_region
      _
    $region13: #{tpu_custom_call.1} parent=1 // pred_fallthru
      _
    // Predicated region
    $region14: #{tpu_custom_call.1} parent=1 // pred_check
      _
    $region15: #{tpu_custom_call.1} parent=1 // pred_check_branch
      %19 = sbr.rel (0) target = $region17
    $region16: #{tpu_custom_call.1} parent=1 // pred_region
      _
    $region17: #{tpu_custom_call.1} parent=1 // pred_fallthru
      _
    // Predicated region
    $region18: #{tpu_custom_call.1} parent=1 // pred_check
      _
    $region19: #{tpu_custom_call.1} parent=1 // pred_check_branch
      %21 = sbr.rel (0) target = $region21
    $region20: #{tpu_custom_call.1} parent=1 // pred_region
      _
    $region21: #{tpu_custom_call.1} parent=1 // pred_fallthru
      _
    // Predicated region
    $region22: #{tpu_custom_call.1} parent=1 // pred_check
      _
    $region23: #{tpu_custom_call.1} parent=1 // pred_check_branch
      %23 = sbr.rel (0) target = $region25
    $region24: #{tpu_custom_call.1} parent=1 // pred_region
      _
    $region25: #{tpu_custom_call.1} parent=1 // pred_fallthru
      _
    %v25 = vld [vmem:[%s0] sm:$0xf]
    %v26 = vld [vmem:[%s0 + $0x4] sm:$0xf]
    %v27 = vld [vmem:[%s0 + $0x8] sm:$0xf]
    %v28 = vld [vmem:[%s0 + $0xc] sm:$0xf]
    %v29 = vld [vmem:[%s2] sm:$0xff]
    %v30 = vld [vmem:[%s2 + $0x8] sm:$0xff]
    %v31 = vld [vmem:[%s2 + $0x10] sm:$0xff]
    %v32 = vld [vmem:[%s2 + $0x18] sm:$0xff]
    %v33 = vld [vmem:[%s2 + $0x20] sm:$0xff]
    %v34 = vld [vmem:[%s2 + $0x28] sm:$0xff]
    %v35 = vld [vmem:[%s2 + $0x30] sm:$0xff]
    %v36 = vld [vmem:[%s2 + $0x38] sm:$0xff]
    %v41 = vunpack.c.l.b16 %v25
    %v42 = vunpack.c.l.b16 %v26
    %v43 = vunpack.c.l.b16 %v27
    %v44 = vunpack.c.l.b16 %v28
    %v45 = vpack.c.b16 %v42, %v41
    %v46 = vpack.c.b16 %v44, %v43
    %v55 = vunpack.c.l.b16 %v29
    %v56 = vunpack.c.h.b16 %v29
    %v57 = vunpack.c.l.b16 %v30
    %v58 = vunpack.c.h.b16 %v30
    %v59 = vunpack.c.l.b16 %v31
    %v60 = vunpack.c.h.b16 %v31
    %v61 = vunpack.c.l.b16 %v32
    %v62 = vunpack.c.h.b16 %v32
    %v63 = vunpack.c.l.b16 %v33
    %v64 = vunpack.c.h.b16 %v33
    %v65 = vunpack.c.l.b16 %v34
    %v66 = vunpack.c.h.b16 %v34
    %v67 = vunpack.c.l.b16 %v35
    %v68 = vunpack.c.h.b16 %v35
    %v69 = vunpack.c.l.b16 %v36
    %v70 = vunpack.c.h.b16 %v36
    %v71 = vpack.c.b16 %v59, %v55
    %v72 = vpack.c.b16 %v60, %v56
    %v73 = vpack.c.b16 %v61, %v57
    %v74 = vpack.c.b16 %v62, %v58
    %v75 = vpack.c.b16 %v67, %v63
    %v76 = vpack.c.b16 %v68, %v64
    %v77 = vpack.c.b16 %v69, %v65
    %v78 = vpack.c.b16 %v70, %v66
    %vm87 = vcmask 261120
    %v89 = vsel %vm87, %v45, 0
    %v92 = vsel %vm87, %v46, 0
    %94 = vmatpush.bf16.msra.mxu0 0
    %95 = vmatpush.bf16.msra.mxu0 0
    %96 = vmatpush.bf16.msra.mxu0 0
    %97 = vmatpush.bf16.msra.mxu0 0
    %98 = vmatpush.bf16.msra.mxu0 0
    %99 = vmatpush.bf16.msra.mxu0 0
    %100 = vmatpush.bf16.msra.mxu0 %v75
    %101 = vmatpush.bf16.msra.mxu0 %v71
    %102 = vmatmul.bf16.gmra.mxu0 %v89
    %v103 = vpop.f32.mrf.mxu0
    %v104 = vadd.f32 0.0, %v103
    %v105 = vpop.f32.mrf.mxu0
    %v106 = vadd.f32 0.0, %v105
    %107 = vmatmul.bf16.gmra.mxu0 %v92
    %v108 = vpop.f32.mrf.mxu0
    %v109 = vadd.f32 0.0, %v108
    %v110 = vpop.f32.mrf.mxu0
    %v111 = vadd.f32 0.0, %v110
    %112 = vdwg.mxu0
    %113 = vmatpush.bf16.msra.mxu0 0
    %114 = vmatpush.bf16.msra.mxu0 0
    %115 = vmatpush.bf16.msra.mxu0 0
    %116 = vmatpush.bf16.msra.mxu0 0
    %117 = vmatpush.bf16.msra.mxu0 0
    %118 = vmatpush.bf16.msra.mxu0 0
    %119 = vmatpush.bf16.msra.mxu0 %v76
    %120 = vmatpush.bf16.msra.mxu0 %v72
    %121 = vmatmul.bf16.gmra.mxu0 %v89
    %v122 = vpop.f32.mrf.mxu0
    %v123 = vadd.f32 0.0, %v122
    %v124 = vpop.f32.mrf.mxu0
    %v125 = vadd.f32 0.0, %v124
    %126 = vmatmul.bf16.gmra.mxu0 %v92
    %v127 = vpop.f32.mrf.mxu0
    %v128 = vadd.f32 0.0, %v127
    %v129 = vpop.f32.mrf.mxu0
    %v130 = vadd.f32 0.0, %v129
    %131 = vdwg.mxu0
    %132 = vmatpush.bf16.msra.mxu0 0
    %133 = vmatpush.bf16.msra.mxu0 0
    %134 = vmatpush.bf16.msra.mxu0 0
    %135 = vmatpush.bf16.msra.mxu0 0
    %136 = vmatpush.bf16.msra.mxu0 0
    %137 = vmatpush.bf16.msra.mxu0 0
    %138 = vmatpush.bf16.msra.mxu0 %v77
    %139 = vmatpush.bf16.msra.mxu0 %v73
    %140 = vmatmul.bf16.gmra.mxu0 %v89
    %v141 = vpop.f32.mrf.mxu0
    %v142 = vadd.f32 0.0, %v141
    %v143 = vpop.f32.mrf.mxu0
    %v144 = vadd.f32 0.0, %v143
    %145 = vmatmul.bf16.gmra.mxu0 %v92
    %v146 = vpop.f32.mrf.mxu0
    %v147 = vadd.f32 0.0, %v146
    %v148 = vpop.f32.mrf.mxu0
    %v149 = vadd.f32 0.0, %v148
    %150 = vdwg.mxu0
    %151 = vmatpush.bf16.msra.mxu0 0
    %152 = vmatpush.bf16.msra.mxu0 0
    %153 = vmatpush.bf16.msra.mxu0 0
    %154 = vmatpush.bf16.msra.mxu0 0
    %155 = vmatpush.bf16.msra.mxu0 0
    %156 = vmatpush.bf16.msra.mxu0 0
    %157 = vmatpush.bf16.msra.mxu0 %v78
    %158 = vmatpush.bf16.msra.mxu0 %v74
    %159 = vmatmul.bf16.gmra.mxu0 %v89
    %v160 = vpop.f32.mrf.mxu0
    %v161 = vadd.f32 0.0, %v160
    %v162 = vpop.f32.mrf.mxu0
    %v163 = vadd.f32 0.0, %v162
    %164 = vmatmul.bf16.gmra.mxu0 %v92
    %v165 = vpop.f32.mrf.mxu0
    %v166 = vadd.f32 0.0, %v165
    %v167 = vpop.f32.mrf.mxu0
    %v168 = vadd.f32 0.0, %v167
    %169 = vdwg.mxu0
    %v170 = vld [vmem:[%s1] sm:$0xff]
    %v171 = vld [vmem:[%s1 + $0x8] sm:$0xff]
    %v172 = vld [vmem:[%s1 + $0x10] sm:$0xff]
    %v173 = vld [vmem:[%s1 + $0x18] sm:$0xff]
    %v174 = vld [vmem:[%s5] sm:$0xf]
    %v176 = vperm.slane %v174, 0
    %v177 = vperm.slane %v174, 1
    %v178 = vperm.slane %v174, 2
    %v179 = vperm.slane %v174, 3
    %v185 = vsel %vm87, %v170, 0
    %v188 = vsel %vm87, %v171, 0
    %v191 = vsel %vm87, %v172, 0
    %v194 = vsel %vm87, %v173, 0
    %196 = vmatpush.msra.mxu0 0.0
    %197 = vmatpush.msra.mxu0 0.0
    %198 = vmatpush.msra.mxu0 0.0
    %199 = vmatpush.msra.mxu0 0.0
    %200 = vmatpush.msra.mxu0 0.0
    %201 = vmatpush.msra.mxu0 0.0
    %202 = vmatpush.msra.mxu0 0.0
    %203 = vmatpush.msra.mxu0 0.0
    %204 = vmatpush.msra.mxu0 0.0
    %205 = vmatpush.msra.mxu0 0.0
    %206 = vmatpush.msra.mxu0 0.0
    %207 = vmatpush.msra.mxu0 0.0
    %208 = vmatpush.msra.mxu0 %v111
    %209 = vmatpush.msra.mxu0 %v109
    %210 = vmatpush.msra.mxu0 %v106
    %211 = vmatpush.msra.mxu0 %v104
    %212 = vmatmul.f32.gmra.mxu0 %v185
    %v213 = vpop.f32.mrf.mxu0
    %v214 = vadd.f32 %v176, %v213
    %215 = vmatmul.f32.gmra.mxu0 %v188
    %v216 = vpop.f32.mrf.mxu0
    %v217 = vadd.f32 %v176, %v216
    %218 = vmatmul.f32.gmra.mxu0 %v191
    %v219 = vpop.f32.mrf.mxu0
    %v220 = vadd.f32 %v176, %v219
    %221 = vmatmul.f32.gmra.mxu0 %v194
    %v222 = vpop.f32.mrf.mxu0
    %v223 = vadd.f32 %v176, %v222
    %224 = vdwg.mxu0
    %225 = vmatpush.msra.mxu0 0.0
    %226 = vmatpush.msra.mxu0 0.0
    %227 = vmatpush.msra.mxu0 0.0
    %228 = vmatpush.msra.mxu0 0.0
    %229 = vmatpush.msra.mxu0 0.0
    %230 = vmatpush.msra.mxu0 0.0
    %231 = vmatpush.msra.mxu0 0.0
    %232 = vmatpush.msra.mxu0 0.0
    %233 = vmatpush.msra.mxu0 0.0
    %234 = vmatpush.msra.mxu0 0.0
    %235 = vmatpush.msra.mxu0 0.0
    %236 = vmatpush.msra.mxu0 0.0
    %237 = vmatpush.msra.mxu0 %v130
    %238 = vmatpush.msra.mxu0 %v128
    %239 = vmatpush.msra.mxu0 %v125
    %240 = vmatpush.msra.mxu0 %v123
    %241 = vmatmul.f32.gmra.mxu0 %v185
    %v242 = vpop.f32.mrf.mxu0
    %v243 = vadd.f32 %v177, %v242
    %244 = vmatmul.f32.gmra.mxu0 %v188
    %v245 = vpop.f32.mrf.mxu0
    %v246 = vadd.f32 %v177, %v245
    %247 = vmatmul.f32.gmra.mxu0 %v191
    %v248 = vpop.f32.mrf.mxu0
    %v249 = vadd.f32 %v177, %v248
    %250 = vmatmul.f32.gmra.mxu0 %v194
    %v251 = vpop.f32.mrf.mxu0
    %v252 = vadd.f32 %v177, %v251
    %253 = vdwg.mxu0
    %254 = vmatpush.msra.mxu0 0.0
    %255 = vmatpush.msra.mxu0 0.0
    %256 = vmatpush.msra.mxu0 0.0
    %257 = vmatpush.msra.mxu0 0.0
    %258 = vmatpush.msra.mxu0 0.0
    %259 = vmatpush.msra.mxu0 0.0
    %260 = vmatpush.msra.mxu0 0.0
    %261 = vmatpush.msra.mxu0 0.0
    %262 = vmatpush.msra.mxu0 0.0
    %263 = vmatpush.msra.mxu0 0.0
    %264 = vmatpush.msra.mxu0 0.0
    %265 = vmatpush.msra.mxu0 0.0
    %266 = vmatpush.msra.mxu0 %v149
    %267 = vmatpush.msra.mxu0 %v147
    %268 = vmatpush.msra.mxu0 %v144
    %269 = vmatpush.msra.mxu0 %v142
    %270 = vmatmul.f32.gmra.mxu0 %v185
    %v271 = vpop.f32.mrf.mxu0
    %v272 = vadd.f32 %v178, %v271
    %273 = vmatmul.f32.gmra.mxu0 %v188
    %v274 = vpop.f32.mrf.mxu0
    %v275 = vadd.f32 %v178, %v274
    %276 = vmatmul.f32.gmra.mxu0 %v191
    %v277 = vpop.f32.mrf.mxu0
    %v278 = vadd.f32 %v178, %v277
    %279 = vmatmul.f32.gmra.mxu0 %v194
    %v280 = vpop.f32.mrf.mxu0
    %v281 = vadd.f32 %v178, %v280
    %282 = vdwg.mxu0
    %283 = vmatpush.msra.mxu0 0.0
    %284 = vmatpush.msra.mxu0 0.0
    %285 = vmatpush.msra.mxu0 0.0
    %286 = vmatpush.msra.mxu0 0.0
    %287 = vmatpush.msra.mxu0 0.0
    %288 = vmatpush.msra.mxu0 0.0
    %289 = vmatpush.msra.mxu0 0.0
    %290 = vmatpush.msra.mxu0 0.0
    %291 = vmatpush.msra.mxu0 0.0
    %292 = vmatpush.msra.mxu0 0.0
    %293 = vmatpush.msra.mxu0 0.0
    %294 = vmatpush.msra.mxu0 0.0
    %295 = vmatpush.msra.mxu0 %v168
    %296 = vmatpush.msra.mxu0 %v166
    %297 = vmatpush.msra.mxu0 %v163
    %298 = vmatpush.msra.mxu0 %v161
    %299 = vmatmul.f32.gmra.mxu0 %v185
    %v300 = vpop.f32.mrf.mxu0
    %v301 = vadd.f32 %v179, %v300
    %302 = vmatmul.f32.gmra.mxu0 %v188
    %v303 = vpop.f32.mrf.mxu0
    %v304 = vadd.f32 %v179, %v303
    %305 = vmatmul.f32.gmra.mxu0 %v191
    %v306 = vpop.f32.mrf.mxu0
    %v307 = vadd.f32 %v179, %v306
    %308 = vmatmul.f32.gmra.mxu0 %v194
    %v309 = vpop.f32.mrf.mxu0
    %v310 = vadd.f32 %v179, %v309
    %311 = vdwg.mxu0
    %v312 = vxor.u32 %v214, 2147483648
    %v313 = vxor.u32 %v243, 2147483648
    %v314 = vxor.u32 %v217, 2147483648
    %v315 = vxor.u32 %v246, 2147483648
    %v316 = vxor.u32 %v220, 2147483648
    %v317 = vxor.u32 %v249, 2147483648
    %v318 = vxor.u32 %v223, 2147483648
    %v319 = vxor.u32 %v252, 2147483648
    %v320 = vmul.f32 %v312, 1.442695
    %v321 = vpow.pop %v320
    %v322 = vmul.f32 %v313, 1.442695
    %v323 = vpow.pop %v322
    %v324 = vmul.f32 %v314, 1.442695
    %v325 = vpow.pop %v324
    %v326 = vmul.f32 %v315, 1.442695
    %v327 = vpow.pop %v326
    %v328 = vmul.f32 %v316, 1.442695
    %v329 = vpow.pop %v328
    %v330 = vmul.f32 %v317, 1.442695
    %v331 = vpow.pop %v330
    %v332 = vmul.f32 %v318, 1.442695
    %v333 = vpow.pop %v332
    %v334 = vmul.f32 %v319, 1.442695
    %v335 = vpow.pop %v334
    %v336 = vadd.f32 %v321, 1.0
    %v337 = vadd.f32 %v323, 1.0
    %v338 = vadd.f32 %v325, 1.0
    %v339 = vadd.f32 %v327, 1.0
    %v340 = vadd.f32 %v329, 1.0
    %v341 = vadd.f32 %v331, 1.0
    %v342 = vadd.f32 %v333, 1.0
    %v343 = vadd.f32 %v335, 1.0
    %v344 = vrcp.pop %v336
    %v345 = vmul.f32 %v336, %v344
    %v346 = vsub.f32 1.0, %v345
    %v347 = vmul.f32 %v344, %v346
    %v348 = vadd.f32 %v344, %v347
    %vm349 = vweird.f32 %v336
    %vm350 = vweird.f32 %v344
    %vm351 = vmor %vm349, %vm350
    %v352 = vsel %vm351, %v344, %v348
    %v353 = vand.u32 2147483647, %v336
    %vm354 = vcmp.eq.f32.partialorder %v353, 8.507059e+37
    %v355 = vand.u32 %v336, 2147483648
    %v356 = vor.u32 1.1754944e-38, %v355
    %v357 = vsel %vm354, %v356, %v352
    %v358 = vmul.f32 1.0, %v357
    %v359 = vrcp.pop %v337
    %v360 = vmul.f32 %v337, %v359
    %v361 = vsub.f32 1.0, %v360
    %v362 = vmul.f32 %v359, %v361
    %v363 = vadd.f32 %v359, %v362
    %vm364 = vweird.f32 %v337
    %vm365 = vweird.f32 %v359
    %vm366 = vmor %vm364, %vm365
    %v367 = vsel %vm366, %v359, %v363
    %v368 = vand.u32 2147483647, %v337
    %vm369 = vcmp.eq.f32.partialorder %v368, 8.507059e+37
    %v370 = vand.u32 %v337, 2147483648
    %v371 = vor.u32 1.1754944e-38, %v370
    %v372 = vsel %vm369, %v371, %v367
    %v373 = vmul.f32 1.0, %v372
    %v374 = vrcp.pop %v338
    %v375 = vmul.f32 %v338, %v374
    %v376 = vsub.f32 1.0, %v375
    %v377 = vmul.f32 %v374, %v376
    %v378 = vadd.f32 %v374, %v377
    %vm379 = vweird.f32 %v338
    %vm380 = vweird.f32 %v374
    %vm381 = vmor %vm379, %vm380
    %v382 = vsel %vm381, %v374, %v378
    %v383 = vand.u32 2147483647, %v338
    %vm384 = vcmp.eq.f32.partialorder %v383, 8.507059e+37
    %v385 = vand.u32 %v338, 2147483648
    %v386 = vor.u32 1.1754944e-38, %v385
    %v387 = vsel %vm384, %v386, %v382
    %v388 = vmul.f32 1.0, %v387
    %v389 = vrcp.pop %v339
    %v390 = vmul.f32 %v339, %v389
    %v391 = vsub.f32 1.0, %v390
    %v392 = vmul.f32 %v389, %v391
    %v393 = vadd.f32 %v389, %v392
    %vm394 = vweird.f32 %v339
    %vm395 = vweird.f32 %v389
    %vm396 = vmor %vm394, %vm395
    %v397 = vsel %vm396, %v389, %v393
    %v398 = vand.u32 2147483647, %v339
    %vm399 = vcmp.eq.f32.partialorder %v398, 8.507059e+37
    %v400 = vand.u32 %v339, 2147483648
    %v401 = vor.u32 1.1754944e-38, %v400
    %v402 = vsel %vm399, %v401, %v397
    %v403 = vmul.f32 1.0, %v402
    %v404 = vrcp.pop %v340
    %v405 = vmul.f32 %v340, %v404
    %v406 = vsub.f32 1.0, %v405
    %v407 = vmul.f32 %v404, %v406
    %v408 = vadd.f32 %v404, %v407
    %vm409 = vweird.f32 %v340
    %vm410 = vweird.f32 %v404
    %vm411 = vmor %vm409, %vm410
    %v412 = vsel %vm411, %v404, %v408
    %v413 = vand.u32 2147483647, %v340
    %vm414 = vcmp.eq.f32.partialorder %v413, 8.507059e+37
    %v415 = vand.u32 %v340, 2147483648
    %v416 = vor.u32 1.1754944e-38, %v415
    %v417 = vsel %vm414, %v416, %v412
    %v418 = vmul.f32 1.0, %v417
    %v419 = vrcp.pop %v341
    %v420 = vmul.f32 %v341, %v419
    %v421 = vsub.f32 1.0, %v420
    %v422 = vmul.f32 %v419, %v421
    %v423 = vadd.f32 %v419, %v422
    %vm424 = vweird.f32 %v341
    %vm425 = vweird.f32 %v419
    %vm426 = vmor %vm424, %vm425
    %v427 = vsel %vm426, %v419, %v423
    %v428 = vand.u32 2147483647, %v341
    %vm429 = vcmp.eq.f32.partialorder %v428, 8.507059e+37
    %v430 = vand.u32 %v341, 2147483648
    %v431 = vor.u32 1.1754944e-38, %v430
    %v432 = vsel %vm429, %v431, %v427
    %v433 = vmul.f32 1.0, %v432
    %v434 = vrcp.pop %v342
    %v435 = vmul.f32 %v342, %v434
    %v436 = vsub.f32 1.0, %v435
    %v437 = vmul.f32 %v434, %v436
    %v438 = vadd.f32 %v434, %v437
    %vm439 = vweird.f32 %v342
    %vm440 = vweird.f32 %v434
    %vm441 = vmor %vm439, %vm440
    %v442 = vsel %vm441, %v434, %v438
    %v443 = vand.u32 2147483647, %v342
    %vm444 = vcmp.eq.f32.partialorder %v443, 8.507059e+37
    %v445 = vand.u32 %v342, 2147483648
    %v446 = vor.u32 1.1754944e-38, %v445
    %v447 = vsel %vm444, %v446, %v442
    %v448 = vmul.f32 1.0, %v447
    %v449 = vrcp.pop %v343
    %v450 = vmul.f32 %v343, %v449
    %v451 = vsub.f32 1.0, %v450
    %v452 = vmul.f32 %v449, %v451
    %v453 = vadd.f32 %v449, %v452
    %vm454 = vweird.f32 %v343
    %vm455 = vweird.f32 %v449
    %vm456 = vmor %vm454, %vm455
    %v457 = vsel %vm456, %v449, %v453
    %v458 = vand.u32 2147483647, %v343
    %vm459 = vcmp.eq.f32.partialorder %v458, 8.507059e+37
    %v460 = vand.u32 %v343, 2147483648
    %v461 = vor.u32 1.1754944e-38, %v460
    %v462 = vsel %vm459, %v461, %v457
    %v463 = vmul.f32 1.0, %v462
    %v464 = vtanh.pop %v272
    %v465 = vtanh.pop %v301
    %v466 = vtanh.pop %v275
    %v467 = vtanh.pop %v304
    %v468 = vtanh.pop %v278
    %v469 = vtanh.pop %v307
    %v470 = vtanh.pop %v281
    %v471 = vtanh.pop %v310
    %v472 = vsub.f32 1.0, %v358
    %v473 = vsub.f32 1.0, %v373
    %v474 = vsub.f32 1.0, %v388
    %v475 = vsub.f32 1.0, %v403
    %v476 = vsub.f32 1.0, %v418
    %v477 = vsub.f32 1.0, %v433
    %v478 = vsub.f32 1.0, %v448
    %v479 = vsub.f32 1.0, %v463
    %v480 = vmul.f32 %v472, %v464
    %v481 = vmul.f32 %v473, %v465
    %v482 = vmul.f32 %v474, %v466
    %v483 = vmul.f32 %v475, %v467
    %v484 = vmul.f32 %v476, %v468
    %v485 = vmul.f32 %v477, %v469
    %v486 = vmul.f32 %v478, %v470
    %v487 = vmul.f32 %v479, %v471
    %v488 = vpack.c.bf16 %v482, %v480
    %v489 = vpack.c.bf16 %v483, %v481
    %v490 = vpack.c.bf16 %v486, %v484
    %v491 = vpack.c.bf16 %v487, %v485
    %v492 = vld [vmem:[%s3] sm:$0xf]
    %v493 = vld [vmem:[%s3 + $0x4] sm:$0xf]
    %v494 = vld [vmem:[%s3 + $0x8] sm:$0xf]
    %v495 = vld [vmem:[%s3 + $0xc] sm:$0xf]
    %v496 = vld [vmem:[%s3 + $0x10] sm:$0xf]
    %v497 = vld [vmem:[%s3 + $0x14] sm:$0xf]
    %v498 = vld [vmem:[%s3 + $0x18] sm:$0xf]
    %v499 = vld [vmem:[%s3 + $0x1c] sm:$0xf]
    %v500 = vld [vmem:[%s3 + $0x20] sm:$0xf]
    %v501 = vld [vmem:[%s3 + $0x24] sm:$0xf]
    %v502 = vld [vmem:[%s3 + $0x28] sm:$0xf]
    %v503 = vld [vmem:[%s3 + $0x2c] sm:$0xf]
    %v504 = vld [vmem:[%s3 + $0x30] sm:$0xf]
    %v505 = vld [vmem:[%s3 + $0x34] sm:$0xf]
    %v506 = vld [vmem:[%s3 + $0x38] sm:$0xf]
    %v507 = vld [vmem:[%s3 + $0x3c] sm:$0xf]
    %v508 = vld [vmem:[%s3 + $0x40] sm:$0xf]
    %v509 = vld [vmem:[%s3 + $0x44] sm:$0xf]
    %v510 = vld [vmem:[%s3 + $0x48] sm:$0xf]
    %v511 = vld [vmem:[%s3 + $0x4c] sm:$0xf]
    %v512 = vld [vmem:[%s3 + $0x50] sm:$0xf]
    %v513 = vld [vmem:[%s3 + $0x54] sm:$0xf]
    %v514 = vld [vmem:[%s3 + $0x58] sm:$0xf]
    %v515 = vld [vmem:[%s3 + $0x5c] sm:$0xf]
    %v516 = vld [vmem:[%s3 + $0x60] sm:$0xf]
    %v517 = vld [vmem:[%s3 + $0x64] sm:$0xf]
    %v518 = vld [vmem:[%s3 + $0x68] sm:$0xf]
    %v519 = vld [vmem:[%s3 + $0x6c] sm:$0xf]
    %v520 = vld [vmem:[%s3 + $0x70] sm:$0xf]
    %v521 = vld [vmem:[%s3 + $0x74] sm:$0xf]
    %v522 = vld [vmem:[%s3 + $0x78] sm:$0xf]
    %v523 = vld [vmem:[%s3 + $0x7c] sm:$0xf]
    %v556 = vunpack.c.l.b16 %v492
    %v557 = vunpack.c.l.b16 %v493
    %v558 = vunpack.c.l.b16 %v494
    %v559 = vunpack.c.l.b16 %v495
    %v560 = vunpack.c.l.b16 %v496
    %v561 = vunpack.c.l.b16 %v497
    %v562 = vunpack.c.l.b16 %v498
    %v563 = vunpack.c.l.b16 %v499
    %v564 = vunpack.c.l.b16 %v500
    %v565 = vunpack.c.l.b16 %v501
    %v566 = vunpack.c.l.b16 %v502
    %v567 = vunpack.c.l.b16 %v503
    %v568 = vunpack.c.l.b16 %v504
    %v569 = vunpack.c.l.b16 %v505
    %v570 = vunpack.c.l.b16 %v506
    %v571 = vunpack.c.l.b16 %v507
    %v572 = vunpack.c.l.b16 %v508
    %v573 = vunpack.c.l.b16 %v509
    %v574 = vunpack.c.l.b16 %v510
    %v575 = vunpack.c.l.b16 %v511
    %v576 = vunpack.c.l.b16 %v512
    %v577 = vunpack.c.l.b16 %v513
    %v578 = vunpack.c.l.b16 %v514
    %v579 = vunpack.c.l.b16 %v515
    %v580 = vunpack.c.l.b16 %v516
    %v581 = vunpack.c.l.b16 %v517
    %v582 = vunpack.c.l.b16 %v518
    %v583 = vunpack.c.l.b16 %v519
    %v584 = vunpack.c.l.b16 %v520
    %v585 = vunpack.c.l.b16 %v521
    %v586 = vunpack.c.l.b16 %v522
    %v587 = vunpack.c.l.b16 %v523
    %v588 = vpack.c.b16 %v557, %v556
    %v589 = vpack.c.b16 %v559, %v558
    %v590 = vpack.c.b16 %v561, %v560
    %v591 = vpack.c.b16 %v563, %v562
    %v592 = vpack.c.b16 %v565, %v564
    %v593 = vpack.c.b16 %v567, %v566
    %v594 = vpack.c.b16 %v569, %v568
    %v595 = vpack.c.b16 %v571, %v570
    %v596 = vpack.c.b16 %v573, %v572
    %v597 = vpack.c.b16 %v575, %v574
    %v598 = vpack.c.b16 %v577, %v576
    %v599 = vpack.c.b16 %v579, %v578
    %v600 = vpack.c.b16 %v581, %v580
    %v601 = vpack.c.b16 %v583, %v582
    %v602 = vpack.c.b16 %v585, %v584
    %v603 = vpack.c.b16 %v587, %v586
    %620 = vmatpush.bf16.msra.mxu0 %v595
    %621 = vmatpush.bf16.msra.mxu0 %v594
    %622 = vmatpush.bf16.msra.mxu0 %v593
    %623 = vmatpush.bf16.msra.mxu0 %v592
    %624 = vmatpush.bf16.msra.mxu0 %v591
    %625 = vmatpush.bf16.msra.mxu0 %v590
    %626 = vmatpush.bf16.msra.mxu0 %v589
    %627 = vmatpush.bf16.msra.mxu0 %v588
    %628 = vmatmul.bf16.gmra.mxu0 %v488
    %v629 = vpop.f32.mrf.mxu0
    %v630 = vadd.f32 0.0, %v629
    %v631 = vpop.f32.mrf.mxu0
    %v632 = vadd.f32 0.0, %v631
    %633 = vmatmul.bf16.gmra.mxu0 %v490
    %v634 = vpop.f32.mrf.mxu0
    %v635 = vadd.f32 0.0, %v634
    %v636 = vpop.f32.mrf.mxu0
    %v637 = vadd.f32 0.0, %v636
    %638 = vdwg.mxu0
    %639 = vmatpush.bf16.msra.mxu0 %v603
    %640 = vmatpush.bf16.msra.mxu0 %v602
    %641 = vmatpush.bf16.msra.mxu0 %v601
    %642 = vmatpush.bf16.msra.mxu0 %v600
    %643 = vmatpush.bf16.msra.mxu0 %v599
    %644 = vmatpush.bf16.msra.mxu0 %v598
    %645 = vmatpush.bf16.msra.mxu0 %v597
    %646 = vmatpush.bf16.msra.mxu0 %v596
    %647 = vmatmul.bf16.gmra.mxu0 %v489
    %v648 = vpop.f32.mrf.mxu0
    %v649 = vadd.f32 %v630, %v648
    %v650 = vpop.f32.mrf.mxu0
    %v651 = vadd.f32 %v632, %v650
    %652 = vmatmul.bf16.gmra.mxu0 %v491
    %v653 = vpop.f32.mrf.mxu0
    %v654 = vadd.f32 %v635, %v653
    %v655 = vpop.f32.mrf.mxu0
    %v656 = vadd.f32 %v637, %v655
    %657 = vdwg.mxu0
    %v658 = vmax.f32 %v649, 0.0
    %v659 = vmax.f32 %v651, 0.0
    %v660 = vmax.f32 %v654, 0.0
    %v661 = vmax.f32 %v656, 0.0
    %v662 = vpack.c.bf16 %v659, %v658
    %v663 = vpack.c.bf16 %v661, %v660
    %v664 = vld [vmem:[%s4] sm:$0xf]
    %v665 = vld [vmem:[%s4 + $0x4] sm:$0xf]
    %v666 = vld [vmem:[%s4 + $0x8] sm:$0xf]
    %v667 = vld [vmem:[%s4 + $0xc] sm:$0xf]
    %v668 = vld [vmem:[%s5 + $0x4] sm:$0x1]
    %v670 = vperm.slane %v668, 0
    %v676 = vunpack.c.l.b16 %v664
    %v677 = vunpack.c.l.b16 %v665
    %v678 = vunpack.c.l.b16 %v666
    %v679 = vunpack.c.l.b16 %v667
    %v680 = vpack.c.b16 %v677, %v676
    %v681 = vpack.c.b16 %v679, %v678
    %v685 = vsel %vm87, %v662, 0
    %v688 = vsel %vm87, %v663, 0
    %690 = vmatpush.bf16.msra.mxu0 0
    %691 = vmatpush.bf16.msra.mxu0 0
    %692 = vmatpush.bf16.msra.mxu0 0
    %693 = vmatpush.bf16.msra.mxu0 0
    %694 = vmatpush.bf16.msra.mxu0 0
    %695 = vmatpush.bf16.msra.mxu0 0
    %696 = vmatpush.bf16.msra.mxu0 %v681
    %697 = vmatpush.bf16.msra.mxu0 %v680
    %698 = vmatmul.bf16.gmra.mxu0 %v685
    %v699 = vpop.f32.mrf.mxu0
    %v700 = vadd.f32 %v670, %v699
    %v701 = vpop.f32.mrf.mxu0
    %v702 = vadd.f32 %v670, %v701
    %703 = vmatmul.bf16.gmra.mxu0 %v688
    %v704 = vpop.f32.mrf.mxu0
    %v705 = vadd.f32 %v670, %v704
    %v706 = vpop.f32.mrf.mxu0
    %v707 = vadd.f32 %v670, %v706
    %708 = vdwg.mxu0
    %709 = vst [vmem:[#allocation2] sm:$0xff] %v700
    %710 = vst [vmem:[#allocation2 + $0x8] sm:$0xff] %v702
    %711 = vst [vmem:[#allocation2 + $0x10] sm:$0xff] %v705
    %712 = vst [vmem:[#allocation2 + $0x18] sm:$0xff] %v707
    // Predicated region
    $region26: #{tpu_custom_call.1} parent=1 // pred_check
      _
    $region27: #{tpu_custom_call.1} parent=1 // pred_check_branch
      %714 = sbr.rel (0) target = $region29
    $region28: #{tpu_custom_call.1} parent=1 // pred_region
      %716 = vsyncadd [#allocation3], 0
      %s717 = sshll.u32 [#allocation2], 4
      %s718 = int_to_ptr.vmem [resolvable:$true] %s717
      %s719 = sshll.u32 %s6, 4
      %s720 = int_to_ptr.hbm [resolvable:$true] %s719
      %725 = dma.vmem_to_hbm [thread:$0]  %s718, 512, %s720, [#allocation3], 128, 128, 8
    $region29: #{tpu_custom_call.1} parent=1 // pred_fallthru
      _
    // Predicated region
    $region30: #{tpu_custom_call.1} parent=1 // pred_check
      _
    $region31: #{tpu_custom_call.1} parent=1 // pred_check_branch
      %727 = sbr.rel (0) target = $region33
    $region32: #{tpu_custom_call.1} parent=1 // pred_region
      %729 = dma.done [#allocation3], 512
    $region33: #{tpu_custom_call.1} parent=1 // pred_fallthru
      _
    %730 = vsyncpa [#allocation3], 1

</llo_original>
